<compile_context>
chip_gen: v5e
topology: v5e:2x2
jax: 0.10.0
libtpu: 0.0.40
codegen_flags: <defaults>
</compile_context>

<pallas_src>
from functools import partial

import jax
import jax.numpy as jnp
from jax.experimental import pallas as pl
from jax.experimental.pallas import tpu as pltpu


# ----------------------------------------------------------------------------
# Per-generation VMEM capacity (trace-time query, cached, conservative fallback)
# ----------------------------------------------------------------------------
_VMEM_CAP = None


def _vmem_capacity_bytes():
    global _VMEM_CAP
    if _VMEM_CAP is None:
        cap = None
        try:
            cap = int(getattr(pltpu.get_tpu_info(), "vmem_capacity_bytes", 0)) or None
        except Exception:
            cap = None
        _VMEM_CAP = cap if cap is not None else 64 * 1024 * 1024  # v7x-safe default
    return _VMEM_CAP


# ----------------------------------------------------------------------------
# Fused single-pass kernel: GAP + down-conv + PReLU + up-convs + channel softmax
# + apply, all on a resident (1, C, HW) block per batch element.
# ----------------------------------------------------------------------------
def _skff_fused_kernel(wdT_ref, bd_ref, alpha_ref, wuF_ref, bu_ref,
                       f1_ref, f2_ref, f3_ref, o_ref):
    C = f1_ref.shape[1]
    hw = f1_ref.shape[2]

    f1 = f1_ref[0].astype(jnp.float32)          # (C, HW)
    f2 = f2_ref[0].astype(jnp.float32)
    f3 = f3_ref[0].astype(jnp.float32)

    x = f1 + f2 + f3
    gap = jnp.sum(x, axis=-1, keepdims=True) * jnp.float32(1.0 / hw)      # (C, 1)

    # d[h] = sum_c wd[h, c] * gap[c] + bd[h]   (broadcast-mul + sublane reduce)
    d = jnp.sum(wdT_ref[...] * gap, axis=0, keepdims=True) + bd_ref[...]  # (1, hidden)
    a = alpha_ref[...]                                                    # (1, 1)
    d = jnp.where(d >= 0.0, d, a * d)                                     # PReLU

    # logits[k*C + c] = sum_h wu[k, c, h] * d[h] + bu[k, c]
    logits = jnp.sum(wuF_ref[...] * d, axis=-1, keepdims=True) + bu_ref[...]  # (3C, 1)

    def channel_softmax(l):                      # softmax over the channel axis
        m = jnp.max(l, axis=0, keepdims=True)
        e = jnp.exp(l - m)
        return e / jnp.sum(e, axis=0, keepdims=True)

    s1 = channel_softmax(logits[0:C])            # (C, 1)
    s2 = channel_softmax(logits[C:2 * C])
    s3 = channel_softmax(logits[2 * C:3 * C])

    o_ref[0] = (f1 * s1 + f2 * s2 + f3 * s3).astype(o_ref.dtype)


def _skff_fused_pallas(wdT, bd2, alpha2, wuF, bu2, f1f, f2f, f3f, vmem_cap):
    B, C, HW = f1f.shape
    hidden = wdT.shape[1]
    itemsize = jnp.dtype(f1f.dtype).itemsize

    def wspec(shape):
        return pl.BlockSpec(shape, lambda b, _s=shape: tuple(0 for _ in _s))

    fspec = pl.BlockSpec((1, C, HW), lambda b: (b, 0, 0))

    weight_bytes = (C * hidden + hidden + 1 + 3 * C * hidden + 3 * C) * 4
    cost = pl.CostEstimate(
        flops=int(9 * B * C * HW + 8 * B * C * hidden),
        transcendentals=int(3 * B * C),
        bytes_accessed=int(4 * B * C * HW * itemsize + B * weight_bytes),
    )

    return pl.pallas_call(
        _skff_fused_kernel,
        out_shape=jax.ShapeDtypeStruct((B, C, HW), f1f.dtype),
        grid=(B,),
        in_specs=[
            wspec((C, hidden)),       # wd^T
            wspec((1, hidden)),       # bd
            wspec((1, 1)),            # PReLU alpha
            wspec((3 * C, hidden)),   # wu flattened (3C, hidden)
            wspec((3 * C, 1)),        # bu flattened (3C, 1)
            fspec, fspec, fspec,
        ],
        out_specs=fspec,
        compiler_params=pltpu.CompilerParams(
            dimension_semantics=("parallel",),
            vmem_limit_bytes=int(vmem_cap // 2),
        ),
        cost_estimate=cost,
    )(wdT, bd2, alpha2, wuF, bu2, f1f, f2f, f3f)


# ----------------------------------------------------------------------------
# Fallback apply kernel: out = f1*s1 + f2*s2 + f3*s3 (scales precomputed, f32 MAC)
# ----------------------------------------------------------------------------
def _skff_apply_kernel(s_ref, f1_ref, f2_ref, f3_ref, o_ref):
    s = s_ref[...]                               # (Bt, 3, C, 1)  f32
    s1, s2, s3 = s[:, 0], s[:, 1], s[:, 2]       # (Bt, C, 1) each
    acc = (f1_ref[...].astype(jnp.float32) * s1
           + f2_ref[...].astype(jnp.float32) * s2
           + f3_ref[...].astype(jnp.float32) * s3)
    o_ref[...] = acc.astype(o_ref.dtype)


def _plan_apply_tiles(B, C, HW, itemsize, budget_bytes, tile_hw=None):
    """Pick (batch_tile, lane_tile). lane_tile is a multiple of 128 so that the
    per-step VMEM footprint (4 double-buffered streams + f32 MAC temporaries)
    stays within budget_bytes; in the small-HW regime batch rows are packed so
    each DMA stream moves >= ~2 MiB per grid step."""
    hw_ceil = -(-HW // 128) * 128
    cost_per_lane = C * (8 * itemsize + 12)      # 4 streams x 2 bufs + f32 temps
    if tile_hw is None:
        tile_hw = (budget_bytes // cost_per_lane // 128) * 128
    tile_hw = max(128, (min(tile_hw, hw_ceil) // 128) * 128)

    bt = 1
    if tile_hw >= hw_ceil:                       # one lane tile covers all of HW
        tile_hw = hw_ceil
        target = 2 * 1024 * 1024
        per_b_stream = C * hw_ceil * itemsize
        per_b_cost = hw_ceil * cost_per_lane
        bt = min(B,
                 max(1, -(-target // per_b_stream)),
                 max(1, budget_bytes // per_b_cost))
    return int(max(1, bt)), int(tile_hw)


def _skff_apply_pallas(scales, f1f, f2f, f3f, bt, thw, vmem_cap):
    B, C, HW = f1f.shape
    itemsize = jnp.dtype(f1f.dtype).itemsize
    nb = -(-B // bt)
    nt = -(-HW // thw)
    grid = (nb * nt,)                            # flat parallel grid -> even 2-TC split

    fspec = pl.BlockSpec((bt, C, thw), lambda i: (i // nt, 0, i % nt))
    sspec = pl.BlockSpec((bt, 3, C, 1), lambda i: (i // nt, 0, 0, 0))

    cost = pl.CostEstimate(
        flops=int(5 * B * C * HW),
        transcendentals=0,
        bytes_accessed=int(4 * B * C * HW * itemsize + 3 * B * C * 4),
    )

    return pl.pallas_call(
        _skff_apply_kernel,
        out_shape=jax.ShapeDtypeStruct((B, C, HW), f1f.dtype),
        grid=grid,
        in_specs=[sspec, fspec, fspec, fspec],
        out_specs=fspec,
        compiler_params=pltpu.CompilerParams(
            dimension_semantics=("parallel",),
            vmem_limit_bytes=int(vmem_cap // 2),
        ),
        cost_estimate=cost,
    )(scales, f1f, f2f, f3f)


# ----------------------------------------------------------------------------
# Full forward (NCHW in / NCHW out).  Weights in PyTorch layout:
#   wd: (hidden, C)  bd: (hidden,)  alpha: scalar (shared PReLU)
#   wu: (3, C, hidden)  bu: (3, C)
# ----------------------------------------------------------------------------
@partial(jax.jit, static_argnames=("tile_hw", "force_two_pass"))
def skff_forward(f1, f2, f3, wd, bd, alpha, wu, bu, *,
                 tile_hw=None, force_two_pass=False):
    B, C, H, W = f1.shape
    HW = H * W
    hidden = wd.shape[0]
    itemsize = jnp.dtype(f1.dtype).itemsize
    vmem_cap = _vmem_capacity_bytes()

    f1f = f1.reshape(B, C, HW)
    f2f = f2.reshape(B, C, HW)
    f3f = f3.reshape(B, C, HW)

    # Per-batch fused working set: 4 double-buffered streams + f32 intermediates.
    fused_step_bytes = C * HW * (8 * itemsize + 5 * 4)
    fused_budget = (3 * vmem_cap) // 8           # ~24 MiB on v7x, ~48 MiB on v5e/v6e
    use_fused = (not force_two_pass) and (tile_hw is None) \
        and fused_step_bytes <= fused_budget

    if use_fused:
        wdT = wd.astype(jnp.float32).T                                  # (C, hidden)
        bd2 = bd.astype(jnp.float32).reshape(1, hidden)                 # (1, hidden)
        alpha2 = jnp.asarray(alpha, jnp.float32).reshape(1, 1)          # (1, 1)
        wuF = wu.astype(jnp.float32).reshape(3 * C, hidden)             # (3C, hidden)
        bu2 = bu.astype(jnp.float32).reshape(3 * C, 1)                  # (3C, 1)
        out = _skff_fused_pallas(wdT, bd2, alpha2, wuF, bu2,
                                 f1f, f2f, f3f, vmem_cap)
    else:
        # --- tiny batched pre-pass (f32 accumulation; mean is linear so no
        #     (B,C,H,W) temporary is materialized) ---
        gap = (jnp.mean(f1f, axis=-1, dtype=jnp.float32)
               + jnp.mean(f2f, axis=-1, dtype=jnp.float32)
               + jnp.mean(f3f, axis=-1, dtype=jnp.float32))             # (B, C)
        d = gap @ wd.astype(jnp.float32).T + bd.astype(jnp.float32)     # (B, hidden)
        alpha32 = jnp.asarray(alpha, jnp.float32)
        d = jnp.where(d >= 0, d, alpha32 * d)                           # PReLU
        wu_flat = jnp.transpose(wu.astype(jnp.float32), (2, 0, 1)).reshape(hidden, 3 * C)
        logits = (d @ wu_flat).reshape(B, 3, C) + bu.astype(jnp.float32)[None]
        scales = jax.nn.softmax(logits, axis=-1)[..., None]             # (B,3,C,1) f32

        # --- lane-dense apply pass (no padding; ragged blocks are masked) ---
        bt, thw = _plan_apply_tiles(B, C, HW, itemsize, vmem_cap // 4, tile_hw)
        out = _skff_apply_pallas(scales, f1f, f2f, f3f, bt, thw, vmem_cap)

    return out.reshape(B, C, H, W)


# ----------------------------------------------------------------------------
# Plain-JAX reference mirroring the PyTorch forward exactly (NCHW).
# ----------------------------------------------------------------------------
def skff_reference(f1, f2, f3, wd, bd, alpha, wu, bu):
    x = f1 + f2 + f3
    gap = jnp.mean(x, axis=(2, 3))                                      # (B, C)
    d = gap @ wd.T + bd
    d = jnp.maximum(d, 0.0) + alpha * jnp.minimum(d, 0.0)
    ss = []
    for k in range(3):
        logits = d @ wu[k].T + bu[k]                                    # (B, C)
        ss.append(jax.nn.softmax(logits, axis=-1))                      # channel softmax
    s1, s2, s3 = [s[:, :, None, None] for s in ss]
    return f1 * s1 + f2 * s2 + f3 * s3


if __name__ == "__main__":
    B, C, H, W = 2, 32, 16, 16
    reduction = 8
    hidden = C // reduction

    key = jax.random.PRNGKey(0)
    k = jax.random.split(key, 7)

    f1 = jax.random.normal(k[0], (B, C, H, W), jnp.float32)
    f2 = jax.random.normal(k[1], (B, C, H, W), jnp.float32)
    f3 = jax.random.normal(k[2], (B, C, H, W), jnp.float32)

    # Parameters in PyTorch conv layouts.
    wd = 0.1 * jax.random.normal(k[3], (hidden, C), jnp.float32)     # down conv weight
    bd = 0.1 * jax.random.normal(k[4], (hidden,), jnp.float32)       # down conv bias
    alpha = jnp.float32(0.25)                                        # nn.PReLU default
    wu = 0.1 * jax.random.normal(k[5], (3, C, hidden), jnp.float32)  # 3 up conv weights
    bu = 0.1 * jax.random.normal(k[6], (3, C), jnp.float32)          # 3 up conv biases

    ref = skff_reference(f1, f2, f3, wd, bd, alpha, wu, bu)

    def check(out, ref_, tag):
        assert out.shape == ref_.shape
        err = float(jnp.max(jnp.abs(out - ref_)))
        assert jnp.allclose(out, ref_, atol=1e-5, rtol=1e-5), f"{tag}: max abs err {err}"

    # 1) fused single-pass kernel (default path for VMEM-resident shapes)
    out = jax.block_until_ready(skff_forward(f1, f2, f3, wd, bd, alpha, wu, bu))
    check(out, ref, "fused")

    # 2) two-pass fallback, forced small lane tile -> flat multi-step grid
    out2 = jax.block_until_ready(
        skff_forward(f1, f2, f3, wd, bd, alpha, wu, bu, tile_hw=128))
    check(out2, ref, "two-pass tile_hw=128")

    # 3) two-pass fallback, default planning (batch-tiled small-HW regime)
    out3 = jax.block_until_ready(
        skff_forward(f1, f2, f3, wd, bd, alpha, wu, bu, force_two_pass=True))
    check(out3, ref, "two-pass default")

    # 4) spatial size not a multiple of 128 -> ragged blocks, no padding, both paths
    H2 = W2 = 9
    g1 = jax.random.normal(k[0], (B, C, H2, W2), jnp.float32)
    g2 = jax.random.normal(k[1], (B, C, H2, W2), jnp.float32)
    g3 = jax.random.normal(k[2], (B, C, H2, W2), jnp.float32)
    ref2 = skff_reference(g1, g2, g3, wd, bd, alpha, wu, bu)
    out4 = jax.block_until_ready(skff_forward(g1, g2, g3, wd, bd, alpha, wu, bu))
    check(out4, ref2, "fused ragged HW")
    out5 = jax.block_until_ready(
        skff_forward(g1, g2, g3, wd, bd, alpha, wu, bu, force_two_pass=True))
    check(out5, ref2, "two-pass ragged HW")

    print("KERNEL_OK")
</pallas_src>

<mosaic_0001>
module attributes {stable_mosaic.version = 11 : i64} {
  func.func @_skff_fused_kernel(%arg0: i32, %arg1: memref<32x4xf32, #tpu.memory_space<vmem>>, %arg2: memref<1x4xf32, #tpu.memory_space<vmem>>, %arg3: memref<1x1xf32, #tpu.memory_space<vmem>>, %arg4: memref<96x4xf32, #tpu.memory_space<vmem>>, %arg5: memref<96x1xf32, #tpu.memory_space<vmem>>, %arg6: memref<1x32x256xf32, #tpu.memory_space<vmem>>, %arg7: memref<1x32x256xf32, #tpu.memory_space<vmem>>, %arg8: memref<1x32x256xf32, #tpu.memory_space<vmem>>, %arg9: memref<1x32x256xf32, #tpu.memory_space<vmem>>) attributes {dimension_semantics = [#tpu.dimension_semantics<parallel>], iteration_bounds = array<i64: 2>, scalar_prefetch = 0 : i64, scratch_operands = 0 : i64, tpu.core_type = #tpu.core_type<tc>, window_params = [{pipeline_mode = #tpu.pipeline_mode<synchronous>, transform_indices = @transform_0, window_bounds = array<i64: 32, 4>}, {pipeline_mode = #tpu.pipeline_mode<synchronous>, transform_indices = @transform_1, window_bounds = array<i64: 1, 4>}, {pipeline_mode = #tpu.pipeline_mode<synchronous>, transform_indices = @transform_2, window_bounds = array<i64: 1, 1>}, {pipeline_mode = #tpu.pipeline_mode<synchronous>, transform_indices = @transform_3, window_bounds = array<i64: 96, 4>}, {pipeline_mode = #tpu.pipeline_mode<synchronous>, transform_indices = @transform_4, window_bounds = array<i64: 96, 1>}, {transform_indices = @transform_5, window_bounds = array<i64: 1, 32, 256>}, {transform_indices = @transform_6, window_bounds = array<i64: 1, 32, 256>}, {transform_indices = @transform_7, window_bounds = array<i64: 1, 32, 256>}, {transform_indices = @transform_8, window_bounds = array<i64: 1, 32, 256>}]} {
    %c0 = arith.constant 0 : index
    %c0_0 = arith.constant 0 : index
    %c0_1 = arith.constant 0 : index
    %0 = vector.load %arg6[%c0, %c0_0, %c0_1] : memref<1x32x256xf32, #tpu.memory_space<vmem>>, vector<1x32x256xf32>
    %1 = vector.shape_cast %0 : vector<1x32x256xf32> to vector<32x256xf32>
    %c0_2 = arith.constant 0 : index
    %c0_3 = arith.constant 0 : index
    %c0_4 = arith.constant 0 : index
    %2 = vector.load %arg7[%c0_2, %c0_3, %c0_4] : memref<1x32x256xf32, #tpu.memory_space<vmem>>, vector<1x32x256xf32>
    %3 = vector.shape_cast %2 : vector<1x32x256xf32> to vector<32x256xf32>
    %c0_5 = arith.constant 0 : index
    %c0_6 = arith.constant 0 : index
    %c0_7 = arith.constant 0 : index
    %4 = vector.load %arg8[%c0_5, %c0_6, %c0_7] : memref<1x32x256xf32, #tpu.memory_space<vmem>>, vector<1x32x256xf32>
    %5 = vector.shape_cast %4 : vector<1x32x256xf32> to vector<32x256xf32>
    %6 = arith.addf %1, %3 : vector<32x256xf32>
    %7 = arith.addf %6, %5 : vector<32x256xf32>
    %cst = arith.constant dense<0.000000e+00> : vector<32xf32>
    %8 = vector.multi_reduction <add>, %7, %cst [1] : vector<32x256xf32> to vector<32xf32>
    %9 = vector.shape_cast %8 : vector<32xf32> to vector<32x1xf32>
    %cst_8 = arith.constant 3.906250e-03 : f32
    %10 = vector.broadcast %cst_8 : f32 to vector<32x1xf32>
    %11 = arith.mulf %9, %10 : vector<32x1xf32>
    %c0_9 = arith.constant 0 : index
    %c0_10 = arith.constant 0 : index
    %12 = vector.load %arg1[%c0_9, %c0_10] : memref<32x4xf32, #tpu.memory_space<vmem>>, vector<32x4xf32>
    %13 = vector.broadcast %11 : vector<32x1xf32> to vector<32x4xf32>
    %14 = arith.mulf %12, %13 : vector<32x4xf32>
    %cst_11 = arith.constant dense<0.000000e+00> : vector<4xf32>
    %15 = vector.multi_reduction <add>, %14, %cst_11 [0] : vector<32x4xf32> to vector<4xf32>
    %16 = vector.shape_cast %15 : vector<4xf32> to vector<1x4xf32>
    %c0_12 = arith.constant 0 : index
    %c0_13 = arith.constant 0 : index
    %17 = vector.load %arg2[%c0_12, %c0_13] : memref<1x4xf32, #tpu.memory_space<vmem>>, vector<1x4xf32>
    %18 = arith.addf %16, %17 : vector<1x4xf32>
    %c0_14 = arith.constant 0 : index
    %c0_15 = arith.constant 0 : index
    %19 = vector.load %arg3[%c0_14, %c0_15] : memref<1x1xf32, #tpu.memory_space<vmem>>, vector<1x1xf32>
    %cst_16 = arith.constant 0.000000e+00 : f32
    %20 = vector.broadcast %cst_16 : f32 to vector<1x4xf32>
    %21 = arith.cmpf oge, %18, %20 : vector<1x4xf32>
    %22 = vector.broadcast %19 : vector<1x1xf32> to vector<1x4xf32>
    %23 = arith.mulf %22, %18 : vector<1x4xf32>
    %24 = arith.select %21, %18, %23 : vector<1x4xi1>, vector<1x4xf32>
    %c0_17 = arith.constant 0 : index
    %c0_18 = arith.constant 0 : index
    %25 = vector.load %arg4[%c0_17, %c0_18] : memref<96x4xf32, #tpu.memory_space<vmem>>, vector<96x4xf32>
    %26 = vector.broadcast %24 : vector<1x4xf32> to vector<96x4xf32>
    %27 = arith.mulf %25, %26 : vector<96x4xf32>
    %cst_19 = arith.constant dense<0.000000e+00> : vector<96xf32>
    %28 = vector.multi_reduction <add>, %27, %cst_19 [1] : vector<96x4xf32> to vector<96xf32>
    %29 = vector.shape_cast %28 : vector<96xf32> to vector<96x1xf32>
    %c0_20 = arith.constant 0 : index
    %c0_21 = arith.constant 0 : index
    %30 = vector.load %arg5[%c0_20, %c0_21] : memref<96x1xf32, #tpu.memory_space<vmem>>, vector<96x1xf32>
    %31 = arith.addf %29, %30 : vector<96x1xf32>
    %32 = vector.extract_strided_slice %31 {offsets = [0, 0], sizes = [32, 1], strides = [1, 1]} : vector<96x1xf32> to vector<32x1xf32>
    %cst_22 = arith.constant dense<0xFF800000> : vector<1xf32>
    %33 = vector.multi_reduction <maximumf>, %32, %cst_22 [0] : vector<32x1xf32> to vector<1xf32>
    %34 = vector.shape_cast %33 : vector<1xf32> to vector<1x1xf32>
    %35 = vector.broadcast %34 : vector<1x1xf32> to vector<32x1xf32>
    %36 = arith.subf %32, %35 : vector<32x1xf32>
    %37 = math.exp %36 : vector<32x1xf32>
    %cst_23 = arith.constant dense<0.000000e+00> : vector<1xf32>
    %38 = vector.multi_reduction <add>, %37, %cst_23 [0] : vector<32x1xf32> to vector<1xf32>
    %39 = vector.shape_cast %38 : vector<1xf32> to vector<1x1xf32>
    %40 = vector.broadcast %39 : vector<1x1xf32> to vector<32x1xf32>
    %41 = arith.divf %37, %40 : vector<32x1xf32>
    %42 = vector.extract_strided_slice %31 {offsets = [32, 0], sizes = [32, 1], strides = [1, 1]} : vector<96x1xf32> to vector<32x1xf32>
    %cst_24 = arith.constant dense<0xFF800000> : vector<1xf32>
    %43 = vector.multi_reduction <maximumf>, %42, %cst_24 [0] : vector<32x1xf32> to vector<1xf32>
    %44 = vector.shape_cast %43 : vector<1xf32> to vector<1x1xf32>
    %45 = vector.broadcast %44 : vector<1x1xf32> to vector<32x1xf32>
    %46 = arith.subf %42, %45 : vector<32x1xf32>
    %47 = math.exp %46 : vector<32x1xf32>
    %cst_25 = arith.constant dense<0.000000e+00> : vector<1xf32>
    %48 = vector.multi_reduction <add>, %47, %cst_25 [0] : vector<32x1xf32> to vector<1xf32>
    %49 = vector.shape_cast %48 : vector<1xf32> to vector<1x1xf32>
    %50 = vector.broadcast %49 : vector<1x1xf32> to vector<32x1xf32>
    %51 = arith.divf %47, %50 : vector<32x1xf32>
    %52 = vector.extract_strided_slice %31 {offsets = [64, 0], sizes = [32, 1], strides = [1, 1]} : vector<96x1xf32> to vector<32x1xf32>
    %cst_26 = arith.constant dense<0xFF800000> : vector<1xf32>
    %53 = vector.multi_reduction <maximumf>, %52, %cst_26 [0] : vector<32x1xf32> to vector<1xf32>
    %54 = vector.shape_cast %53 : vector<1xf32> to vector<1x1xf32>
    %55 = vector.broadcast %54 : vector<1x1xf32> to vector<32x1xf32>
    %56 = arith.subf %52, %55 : vector<32x1xf32>
    %57 = math.exp %56 : vector<32x1xf32>
    %cst_27 = arith.constant dense<0.000000e+00> : vector<1xf32>
    %58 = vector.multi_reduction <add>, %57, %cst_27 [0] : vector<32x1xf32> to vector<1xf32>
    %59 = vector.shape_cast %58 : vector<1xf32> to vector<1x1xf32>
    %60 = vector.broadcast %59 : vector<1x1xf32> to vector<32x1xf32>
    %61 = arith.divf %57, %60 : vector<32x1xf32>
    %62 = vector.broadcast %41 : vector<32x1xf32> to vector<32x256xf32>
    %63 = arith.mulf %1, %62 : vector<32x256xf32>
    %64 = vector.broadcast %51 : vector<32x1xf32> to vector<32x256xf32>
    %65 = arith.mulf %3, %64 : vector<32x256xf32>
    %66 = arith.addf %63, %65 : vector<32x256xf32>
    %67 = vector.broadcast %61 : vector<32x1xf32> to vector<32x256xf32>
    %68 = arith.mulf %5, %67 : vector<32x256xf32>
    %69 = arith.addf %66, %68 : vector<32x256xf32>
    %c0_28 = arith.constant 0 : index
    %c0_29 = arith.constant 0 : index
    %c0_30 = arith.constant 0 : index
    %70 = vector.load %arg9[%c0_28, %c0_29, %c0_30] : memref<1x32x256xf32, #tpu.memory_space<vmem>>, vector<1x32x256xf32>
    %71 = vector.shape_cast %70 : vector<1x32x256xf32> to vector<32x256xf32>
    %72 = vector.shape_cast %69 : vector<32x256xf32> to vector<1x32x256xf32>
    tpu.vector_store %arg9[%c0_28, %c0_29, %c0_30], %72 {strides = array<i32>} : memref<1x32x256xf32, #tpu.memory_space<vmem>>, vector<1x32x256xf32>,
    return
  }
  func.func @transform_0(%arg0: i32) -> (i32, i32) {
    %c0_i32 = arith.constant 0 : i32
    %c0_i32_0 = arith.constant 0 : i32
    %c0_i32_1 = arith.constant 0 : i32
    return %c0_i32, %c0_i32_0 : i32, i32
  }
  func.func @transform_1(%arg0: i32) -> (i32, i32) {
    %c0_i32 = arith.constant 0 : i32
    %c0_i32_0 = arith.constant 0 : i32
    %c0_i32_1 = arith.constant 0 : i32
    return %c0_i32, %c0_i32_0 : i32, i32
  }
  func.func @transform_2(%arg0: i32) -> (i32, i32) {
    %c0_i32 = arith.constant 0 : i32
    %c0_i32_0 = arith.constant 0 : i32
    %c0_i32_1 = arith.constant 0 : i32
    return %c0_i32, %c0_i32_0 : i32, i32
  }
  func.func @transform_3(%arg0: i32) -> (i32, i32) {
    %c0_i32 = arith.constant 0 : i32
    %c0_i32_0 = arith.constant 0 : i32
    %c0_i32_1 = arith.constant 0 : i32
    return %c0_i32, %c0_i32_0 : i32, i32
  }
  func.func @transform_4(%arg0: i32) -> (i32, i32) {
    %c0_i32 = arith.constant 0 : i32
    %c0_i32_0 = arith.constant 0 : i32
    %c0_i32_1 = arith.constant 0 : i32
    return %c0_i32, %c0_i32_0 : i32, i32
  }
  func.func @transform_5(%arg0: i32) -> (i32, i32, i32) {
    %c0_i32 = arith.constant 0 : i32
    %c0_i32_0 = arith.constant 0 : i32
    %c0_i32_1 = arith.constant 0 : i32
    return %arg0, %c0_i32, %c0_i32_0 : i32, i32, i32
  }
  func.func @transform_6(%arg0: i32) -> (i32, i32, i32) {
    %c0_i32 = arith.constant 0 : i32
    %c0_i32_0 = arith.constant 0 : i32
    %c0_i32_1 = arith.constant 0 : i32
    return %arg0, %c0_i32, %c0_i32_0 : i32, i32, i32
  }
  func.func @transform_7(%arg0: i32) -> (i32, i32, i32) {
    %c0_i32 = arith.constant 0 : i32
    %c0_i32_0 = arith.constant 0 : i32
    %c0_i32_1 = arith.constant 0 : i32
    return %arg0, %c0_i32, %c0_i32_0 : i32, i32, i32
  }
  func.func @transform_8(%arg0: i32) -> (i32, i32, i32) {
    %c0_i32 = arith.constant 0 : i32
    %c0_i32_0 = arith.constant 0 : i32
    %c0_i32_1 = arith.constant 0 : i32
    return %arg0, %c0_i32, %c0_i32_0 : i32, i32, i32
  }
}

</mosaic_0001>

<llo_original>
// kernel: skff_forward.1
$region0: #{skff_forward.1}
  #allocation0 [shape = 'u32[]', space=smem, size = 0x4, offset = 0x4, fixed_abs, tag = 'smem constant byte address 0x4 - core index']
  #allocation1 [shape = 'u32[72,128]{1,0:T(1,128)}', space=vmem, size = 0x9000, scoped, tag = 'internal scratch']
  #allocation2 [shape = 'f32[1,1]{1,0:T(1,128)S(1)}', space=vmem, size = 0x200, scoped, tag = 'scoped memory for skff_forward.1']
  %s0 = inlined_call_operand.vmem [shape: f32[32,4], index: 0, kind: input, shape index: {}]
  %s1 = inlined_call_operand.vmem [shape: f32[1,4], index: 1, kind: input, shape index: {}]
  %s2 = inlined_call_operand.<no memory space> [shape: f32[1,1], index: 2, kind: input, shape index: {}]
  %s3 = inlined_call_operand.vmem [shape: f32[96,4], index: 3, kind: input, shape index: {}]
  %s4 = inlined_call_operand.vmem [shape: f32[96,1], index: 4, kind: input, shape index: {}]
  %s5 = inlined_call_operand.vmem [shape: f32[2,32,256], index: 5, kind: input, shape index: {}]
  %s6 = inlined_call_operand.vmem [shape: f32[2,32,256], index: 6, kind: input, shape index: {}]
  %s7 = inlined_call_operand.vmem [shape: f32[2,32,256], index: 7, kind: input, shape index: {}]
  %s8 = inlined_call_operand.vmem [shape: f32[2,32,256], index: 8, kind: output, shape index: {}]
  %s9 = sld [smem:[#allocation0]]
  $region65: #{skff_forward.1} parent=0
    _
  %s11 = ssub.s32 1, %s9
  %s12 = scalar_select 0, %s11, %s9
  %v13 = vstv %s2
  %14 = vst [vmem:[#allocation2] sm:$0x1] %v13
  loop: start=0, step=1, limit=4
  $region2: #{skff_forward.1} parent=0 // loop_pre_header
    _
  $region3: #{skff_forward.1} parent=0 // loop_header
    %s16 = sphi 0, %s20
    %p17 = scmp.ge.s32.totalorder %s16, 4
    %s24 = sphi 0, %s24
    %s26 = sphi 0, %s24
    %s27 = sphi 0, %s26
    %s41 = sphi 0, %s27
    %s45 = sphi 0, %s45
    %s47 = sphi 0, %s45
    %s48 = sphi 0, %s47
    %s62 = sphi 0, %s48
    %s66 = sphi 0, %s66
    %s68 = sphi 0, %s66
    %s69 = sphi 0, %s68
    %s83 = sphi 0, %s69
    %s87 = sphi 0, %s87
    %s89 = sphi 0, %s87
    %s90 = sphi 0, %s89
    %s104 = sphi 0, %s90
    %s108 = sphi 0, %s108
    %s110 = sphi 0, %s108
    %s111 = sphi 0, %s110
    %s125 = sphi 0, %s111
    %s131 = sphi 0, %s133
    %s134 = sphi 0, %s131
    %s135 = sphi 0, %s134
    %s151 = sphi 0, %s135
    %s157 = sphi 0, %s159
    %s160 = sphi 0, %s157
    %s161 = sphi 0, %s160
    %s177 = sphi 0, %s161
    %s183 = sphi 0, %s185
    %s186 = sphi 0, %s183
    %s187 = sphi 0, %s186
    %s203 = sphi 0, %s187
    %s209 = sphi 0, %s211
    %s212 = sphi 0, %s209
    %s213 = sphi 0, %s212
    %s229 = sphi 0, %s213
  $region4: #{skff_forward.1} parent=0 // loop_header_branch
    %19 = sbr.rel (%p17) target = $region8
  $region5: #{skff_forward.1} parent=0 // loop_body
    %s21 = ssub.s32 %s16, 1
    %s22 = ssub.s32 %s16, 2
    %s23 = sadd.s32 %s16, 1
    %s25 = sadd.s32 %s24, 1
    %p28 = scmp.eq.s32.totalorder %s16, 1
    %p29 = scmp.ne.s32.totalorder %s24, %s26
    %p30 = scmp.eq.s32.totalorder %s16, 0
    %p31 = por %p29, %p30
    %p32 = scmp.ne.s32.totalorder %s24, %s26
    %p33 = scmp.eq.s32.totalorder %s21, 1
    %p34 = por %p32, %p33
    %p35 = scmp.ne.s32.totalorder %s26, %s27
    %p36 = scmp.eq.s32.totalorder %s21, 0
    %p37 = por %p35, %p36
    %p38 = scmp.ne.s32.totalorder %s26, %s27
    %p39 = scmp.eq.s32.totalorder %s22, 1
    %p40 = por %p38, %p39
    %p42 = scmp.ne.s32.totalorder %s27, %s41
    %p43 = scmp.eq.s32.totalorder %s22, 0
    %p44 = por %p42, %p43
    %s46 = sadd.s32 %s45, 1
    %p49 = scmp.eq.s32.totalorder %s16, 1
    %p50 = scmp.ne.s32.totalorder %s45, %s47
    %p51 = scmp.eq.s32.totalorder %s16, 0
    %p52 = por %p50, %p51
    %p53 = scmp.ne.s32.totalorder %s45, %s47
    %p54 = scmp.eq.s32.totalorder %s21, 1
    %p55 = por %p53, %p54
    %p56 = scmp.ne.s32.totalorder %s47, %s48
    %p57 = scmp.eq.s32.totalorder %s21, 0
    %p58 = por %p56, %p57
    %p59 = scmp.ne.s32.totalorder %s47, %s48
    %p60 = scmp.eq.s32.totalorder %s22, 1
    %p61 = por %p59, %p60
    %p63 = scmp.ne.s32.totalorder %s48, %s62
    %p64 = scmp.eq.s32.totalorder %s22, 0
    %p65 = por %p63, %p64
    %s67 = sadd.s32 %s66, 1
    %p70 = scmp.eq.s32.totalorder %s16, 1
    %p71 = scmp.ne.s32.totalorder %s66, %s68
    %p72 = scmp.eq.s32.totalorder %s16, 0
    %p73 = por %p71, %p72
    %p74 = scmp.ne.s32.totalorder %s66, %s68
    %p75 = scmp.eq.s32.totalorder %s21, 1
    %p76 = por %p74, %p75
    %p77 = scmp.ne.s32.totalorder %s68, %s69
    %p78 = scmp.eq.s32.totalorder %s21, 0
    %p79 = por %p77, %p78
    %p80 = scmp.ne.s32.totalorder %s68, %s69
    %p81 = scmp.eq.s32.totalorder %s22, 1
    %p82 = por %p80, %p81
    %p84 = scmp.ne.s32.totalorder %s69, %s83
    %p85 = scmp.eq.s32.totalorder %s22, 0
    %p86 = por %p84, %p85
    %s88 = sadd.s32 %s87, 1
    %p91 = scmp.eq.s32.totalorder %s16, 1
    %p92 = scmp.ne.s32.totalorder %s87, %s89
    %p93 = scmp.eq.s32.totalorder %s16, 0
    %p94 = por %p92, %p93
    %p95 = scmp.ne.s32.totalorder %s87, %s89
    %p96 = scmp.eq.s32.totalorder %s21, 1
    %p97 = por %p95, %p96
    %p98 = scmp.ne.s32.totalorder %s89, %s90
    %p99 = scmp.eq.s32.totalorder %s21, 0
    %p100 = por %p98, %p99
    %p101 = scmp.ne.s32.totalorder %s89, %s90
    %p102 = scmp.eq.s32.totalorder %s22, 1
    %p103 = por %p101, %p102
    %p105 = scmp.ne.s32.totalorder %s90, %s104
    %p106 = scmp.eq.s32.totalorder %s22, 0
    %p107 = por %p105, %p106
    %s109 = sadd.s32 %s108, 1
    %p112 = scmp.eq.s32.totalorder %s16, 1
    %p113 = scmp.ne.s32.totalorder %s108, %s110
    %p114 = scmp.eq.s32.totalorder %s16, 0
    %p115 = por %p113, %p114
    %p116 = scmp.ne.s32.totalorder %s108, %s110
    %p117 = scmp.eq.s32.totalorder %s21, 1
    %p118 = por %p116, %p117
    %p119 = scmp.ne.s32.totalorder %s110, %s111
    %p120 = scmp.eq.s32.totalorder %s21, 0
    %p121 = por %p119, %p120
    %p122 = scmp.ne.s32.totalorder %s110, %s111
    %p123 = scmp.eq.s32.totalorder %s22, 1
    %p124 = por %p122, %p123
    %p126 = scmp.ne.s32.totalorder %s111, %s125
    %p127 = scmp.eq.s32.totalorder %s22, 0
    %p128 = por %p126, %p127
    %s129 = ssub.s32 %s16, %s23
    %p130 = scmp.eq.s32.totalorder %s129, 0
    %s132 = sadd.s32 %s131, 1
    %s133 = scalar_select %p130, %s131, %s132
    %p136 = pneg %p130
    %p137 = scmp.eq.s32.totalorder %s16, 1
    %p138 = por %p136, %p137
    %p139 = scmp.ne.s32.totalorder %s131, %s134
    %p140 = scmp.eq.s32.totalorder %s16, 0
    %p141 = por %p139, %p140
    %p142 = scmp.ne.s32.totalorder %s131, %s134
    %p143 = scmp.eq.s32.totalorder %s21, 1
    %p144 = por %p142, %p143
    %p145 = scmp.ne.s32.totalorder %s134, %s135
    %p146 = scmp.eq.s32.totalorder %s21, 0
    %p147 = por %p145, %p146
    %p148 = scmp.ne.s32.totalorder %s134, %s135
    %p149 = scmp.eq.s32.totalorder %s22, 1
    %p150 = por %p148, %p149
    %p152 = scmp.ne.s32.totalorder %s135, %s151
    %p153 = scmp.eq.s32.totalorder %s22, 0
    %p154 = por %p152, %p153
    %s155 = ssub.s32 %s16, %s23
    %p156 = scmp.eq.s32.totalorder %s155, 0
    %s158 = sadd.s32 %s157, 1
    %s159 = scalar_select %p156, %s157, %s158
    %p162 = pneg %p156
    %p163 = scmp.eq.s32.totalorder %s16, 1
    %p164 = por %p162, %p163
    %p165 = scmp.ne.s32.totalorder %s157, %s160
    %p166 = scmp.eq.s32.totalorder %s16, 0
    %p167 = por %p165, %p166
    %p168 = scmp.ne.s32.totalorder %s157, %s160
    %p169 = scmp.eq.s32.totalorder %s21, 1
    %p170 = por %p168, %p169
    %p171 = scmp.ne.s32.totalorder %s160, %s161
    %p172 = scmp.eq.s32.totalorder %s21, 0
    %p173 = por %p171, %p172
    %p174 = scmp.ne.s32.totalorder %s160, %s161
    %p175 = scmp.eq.s32.totalorder %s22, 1
    %p176 = por %p174, %p175
    %p178 = scmp.ne.s32.totalorder %s161, %s177
    %p179 = scmp.eq.s32.totalorder %s22, 0
    %p180 = por %p178, %p179
    %s181 = ssub.s32 %s16, %s23
    %p182 = scmp.eq.s32.totalorder %s181, 0
    %s184 = sadd.s32 %s183, 1
    %s185 = scalar_select %p182, %s183, %s184
    %p188 = pneg %p182
    %p189 = scmp.eq.s32.totalorder %s16, 1
    %p190 = por %p188, %p189
    %p191 = scmp.ne.s32.totalorder %s183, %s186
    %p192 = scmp.eq.s32.totalorder %s16, 0
    %p193 = por %p191, %p192
    %p194 = scmp.ne.s32.totalorder %s183, %s186
    %p195 = scmp.eq.s32.totalorder %s21, 1
    %p196 = por %p194, %p195
    %p197 = scmp.ne.s32.totalorder %s186, %s187
    %p198 = scmp.eq.s32.totalorder %s21, 0
    %p199 = por %p197, %p198
    %p200 = scmp.ne.s32.totalorder %s186, %s187
    %p201 = scmp.eq.s32.totalorder %s22, 1
    %p202 = por %p200, %p201
    %p204 = scmp.ne.s32.totalorder %s187, %s203
    %p205 = scmp.eq.s32.totalorder %s22, 0
    %p206 = por %p204, %p205
    %s207 = ssub.s32 %s16, %s23
    %p208 = scmp.eq.s32.totalorder %s207, 0
    %s210 = sadd.s32 %s209, 1
    %s211 = scalar_select %p208, %s209, %s210
    %p214 = pneg %p208
    %p215 = scmp.eq.s32.totalorder %s16, 1
    %p216 = por %p214, %p215
    %p217 = scmp.ne.s32.totalorder %s209, %s212
    %p218 = scmp.eq.s32.totalorder %s16, 0
    %p219 = por %p217, %p218
    %p220 = scmp.ne.s32.totalorder %s209, %s212
    %p221 = scmp.eq.s32.totalorder %s21, 1
    %p222 = por %p220, %p221
    %p223 = scmp.ne.s32.totalorder %s212, %s213
    %p224 = scmp.eq.s32.totalorder %s21, 0
    %p225 = por %p223, %p224
    %p226 = scmp.ne.s32.totalorder %s212, %s213
    %p227 = scmp.eq.s32.totalorder %s22, 1
    %p228 = por %p226, %p227
    %p230 = scmp.ne.s32.totalorder %s213, %s229
    %p231 = scmp.eq.s32.totalorder %s22, 0
    %p232 = por %p230, %p231
    %p233 = scmp.le.s32.totalorder 1, %s16
    %p234 = scmp.lt.s32.totalorder %s16, 3
    %p235 = pnand %p233, %p234
    %p236 = pneg %p235
    // Predicated region
    $region9: #{skff_forward.1} parent=5 // pred_check
      _
    $region10: #{skff_forward.1} parent=5 // pred_check_branch
      %238 = sbr.rel (%p235) target = $region12
    $region11: #{skff_forward.1} parent=5 // pred_region
      %s239 = ssub.s32 %s16, 1
      // Predicated region
      $region13: #{skff_forward.1} parent=11 // pred_check
        %p240 = pneg %p37
      $region14: #{skff_forward.1} parent=11 // pred_check_branch
        %242 = sbr.rel (%p240) target = $region16
      $region15: #{skff_forward.1} parent=11 // pred_region
        _
      $region16: #{skff_forward.1} parent=11 // pred_fallthru
        _
      // Predicated region
      $region17: #{skff_forward.1} parent=11 // pred_check
        %p243 = pneg %p58
      $region18: #{skff_forward.1} parent=11 // pred_check_branch
        %245 = sbr.rel (%p243) target = $region20
      $region19: #{skff_forward.1} parent=11 // pred_region
        _
      $region20: #{skff_forward.1} parent=11 // pred_fallthru
        _
      // Predicated region
      $region21: #{skff_forward.1} parent=11 // pred_check
        %p246 = pneg %p79
      $region22: #{skff_forward.1} parent=11 // pred_check_branch
        %248 = sbr.rel (%p246) target = $region24
      $region23: #{skff_forward.1} parent=11 // pred_region
        _
      $region24: #{skff_forward.1} parent=11 // pred_fallthru
        _
      // Predicated region
      $region25: #{skff_forward.1} parent=11 // pred_check
        %p249 = pneg %p100
      $region26: #{skff_forward.1} parent=11 // pred_check_branch
        %251 = sbr.rel (%p249) target = $region28
      $region27: #{skff_forward.1} parent=11 // pred_region
        _
      $region28: #{skff_forward.1} parent=11 // pred_fallthru
        _
      // Predicated region
      $region29: #{skff_forward.1} parent=11 // pred_check
        %p252 = pneg %p121
      $region30: #{skff_forward.1} parent=11 // pred_check_branch
        %254 = sbr.rel (%p252) target = $region32
      $region31: #{skff_forward.1} parent=11 // pred_region
        _
      $region32: #{skff_forward.1} parent=11 // pred_fallthru
        _
    $region12: #{skff_forward.1} parent=5 // pred_fallthru
      _
    %p255 = scmp.lt.s32.totalorder %s16, 2
    // Predicated region
    $region33: #{skff_forward.1} parent=5 // pred_check
      %p256 = pneg %p255
    $region34: #{skff_forward.1} parent=5 // pred_check_branch
      %258 = sbr.rel (%p256) target = $region36
    $region35: #{skff_forward.1} parent=5 // pred_region
      // Predicated region
      $region37: #{skff_forward.1} parent=35 // pred_check
        %p259 = pneg %p141
      $region38: #{skff_forward.1} parent=35 // pred_check_branch
        %261 = sbr.rel (%p259) target = $region40
      $region39: #{skff_forward.1} parent=35 // pred_region
        %p262 = scmp.lt.s32.totalorder %s16, 1
        %s263 = scalar_select %p262, %s16, 1
        %s264 = smul.addr %s263, 8
        %s265 = smul.addr %s264, 8
        %s266 = scalar_lea.vmem %s5, %s265
      $region40: #{skff_forward.1} parent=35 // pred_fallthru
        _
      // Predicated region
      $region41: #{skff_forward.1} parent=35 // pred_check
        %p267 = pneg %p167
      $region42: #{skff_forward.1} parent=35 // pred_check_branch
        %269 = sbr.rel (%p267) target = $region44
      $region43: #{skff_forward.1} parent=35 // pred_region
        %p270 = scmp.lt.s32.totalorder %s16, 1
        %s271 = scalar_select %p270, %s16, 1
        %s272 = smul.addr %s271, 8
        %s273 = smul.addr %s272, 8
        %s274 = scalar_lea.vmem %s6, %s273
      $region44: #{skff_forward.1} parent=35 // pred_fallthru
        _
      // Predicated region
      $region45: #{skff_forward.1} parent=35 // pred_check
        %p275 = pneg %p193
      $region46: #{skff_forward.1} parent=35 // pred_check_branch
        %277 = sbr.rel (%p275) target = $region48
      $region47: #{skff_forward.1} parent=35 // pred_region
        %p278 = scmp.lt.s32.totalorder %s16, 1
        %s279 = scalar_select %p278, %s16, 1
        %s280 = smul.addr %s279, 8
        %s281 = smul.addr %s280, 8
        %s282 = scalar_lea.vmem %s7, %s281
      $region48: #{skff_forward.1} parent=35 // pred_fallthru
        _
    $region36: #{skff_forward.1} parent=5 // pred_fallthru
      _
    %p283 = scmp.le.s32.totalorder 1, %s16
    %p284 = scmp.lt.s32.totalorder %s16, 3
    %p285 = pnand %p283, %p284
    %p286 = pneg %p285
    // Predicated region
    $region49: #{skff_forward.1} parent=5 // pred_check
      _
    $region50: #{skff_forward.1} parent=5 // pred_check_branch
      %288 = sbr.rel (%p285) target = $region52
    $region51: #{skff_forward.1} parent=5 // pred_region
      %s289 = ssub.s32 %s16, 1
      %p290 = pneg %p37
      %p291 = pneg %p34
      %p292 = pneg %p58
      %p293 = pneg %p55
      %p294 = pneg %p79
      %p295 = pneg %p76
      %p296 = pneg %p100
      %p297 = pneg %p97
      %p298 = pneg %p121
      %p299 = pneg %p118
      %p300 = scmp.lt.s32.totalorder %s21, 1
      %s301 = scalar_select %p300, %s21, 1
      %s302 = smul.addr %s301, 8
      %s303 = smul.addr %s302, 8
      %s304 = scalar_lea.vmem %s5, %s303
      %p305 = pneg %p147
      %p306 = pneg %p144
      %p307 = scmp.lt.s32.totalorder %s21, 1
      %s308 = scalar_select %p307, %s21, 1
      %s309 = smul.addr %s308, 8
      %s310 = smul.addr %s309, 8
      %s311 = scalar_lea.vmem %s6, %s310
      %p312 = pneg %p173
      %p313 = pneg %p170
      %p314 = scmp.lt.s32.totalorder %s21, 1
      %s315 = scalar_select %p314, %s21, 1
      %s316 = smul.addr %s315, 8
      %s317 = smul.addr %s316, 8
      %s318 = scalar_lea.vmem %s7, %s317
      %p319 = pneg %p199
      %p320 = pneg %p196
      %p321 = pneg %p225
      %p322 = pneg %p222
      %p323 = scmp.lt.s32.totalorder %s21, 1
      %s324 = scalar_select %p323, %s21, 1
      %s325 = smul.addr %s324, 8
      %s326 = smul.addr %s325, 8
      %s327 = scalar_lea.vmem %s8, %s326
      %p328 = scmp.lt.s32.totalorder %s21, 1
      %s329 = scalar_select %p328, %s21, 1
      %s330 = smul.addr %s329, 8
      %s331 = smul.addr %s330, 8
      %s332 = scalar_lea.vmem %s5, %s331
      %p333 = scmp.lt.s32.totalorder %s21, 1
      %s334 = scalar_select %p333, %s21, 1
      %s335 = smul.addr %s334, 8
      %s336 = smul.addr %s335, 8
      %s337 = scalar_lea.vmem %s6, %s336
      %p338 = scmp.lt.s32.totalorder %s21, 1
      %s339 = scalar_select %p338, %s21, 1
      %s340 = smul.addr %s339, 8
      %s341 = smul.addr %s340, 8
      %s342 = scalar_lea.vmem %s7, %s341
      %p343 = scmp.lt.s32.totalorder %s21, 1
      %s344 = scalar_select %p343, %s21, 1
      %s345 = smul.addr %s344, 8
      %s346 = smul.addr %s345, 8
      %s347 = scalar_lea.vmem %s8, %s346
      %v348 = vld [vmem:[%s332] sm:$0xff]
      %v349 = vld [vmem:[%s332 + $0x8] sm:$0xff]
      %v350 = vld [vmem:[%s332 + $0x10] sm:$0xff]
      %v351 = vld [vmem:[%s332 + $0x18] sm:$0xff]
      %v352 = vld [vmem:[%s332 + $0x20] sm:$0xff]
      %v353 = vld [vmem:[%s332 + $0x28] sm:$0xff]
      %v354 = vld [vmem:[%s332 + $0x30] sm:$0xff]
      %v355 = vld [vmem:[%s332 + $0x38] sm:$0xff]
      %v356 = vld [vmem:[%s337] sm:$0xff]
      %v357 = vld [vmem:[%s337 + $0x8] sm:$0xff]
      %v358 = vld [vmem:[%s337 + $0x10] sm:$0xff]
      %v359 = vld [vmem:[%s337 + $0x18] sm:$0xff]
      %v360 = vld [vmem:[%s337 + $0x20] sm:$0xff]
      %v361 = vld [vmem:[%s337 + $0x28] sm:$0xff]
      %v362 = vld [vmem:[%s337 + $0x30] sm:$0xff]
      %v363 = vld [vmem:[%s337 + $0x38] sm:$0xff]
      %v364 = vld [vmem:[%s342] sm:$0xff]
      %v365 = vld [vmem:[%s342 + $0x8] sm:$0xff]
      %v366 = vld [vmem:[%s342 + $0x10] sm:$0xff]
      %v367 = vld [vmem:[%s342 + $0x18] sm:$0xff]
      %v368 = vld [vmem:[%s342 + $0x20] sm:$0xff]
      %v369 = vld [vmem:[%s342 + $0x28] sm:$0xff]
      %v370 = vld [vmem:[%s342 + $0x30] sm:$0xff]
      %v371 = vld [vmem:[%s342 + $0x38] sm:$0xff]
      %v372 = vadd.f32 %v348, %v356
      %v373 = vadd.f32 %v349, %v357
      %v374 = vadd.f32 %v350, %v358
      %v375 = vadd.f32 %v351, %v359
      %v376 = vadd.f32 %v352, %v360
      %v377 = vadd.f32 %v353, %v361
      %v378 = vadd.f32 %v354, %v362
      %v379 = vadd.f32 %v355, %v363
      %v380 = vadd.f32 %v372, %v364
      %v381 = vadd.f32 %v373, %v365
      %v382 = vadd.f32 %v374, %v366
      %v383 = vadd.f32 %v375, %v367
      %v384 = vadd.f32 %v376, %v368
      %v385 = vadd.f32 %v377, %v369
      %v386 = vadd.f32 %v378, %v370
      %v387 = vadd.f32 %v379, %v371
      %v388 = vadd.f32 %v380, %v381
      %389 = vadd.xlane.f32.xlu0 %v388
      %v390 = vpop.xlane.xlu0 %389
      %v391 = vadd.f32 %v382, %v383
      %392 = vadd.xlane.f32.xlu0 %v391
      %v393 = vpop.xlane.xlu0 %392
      %v394 = vadd.f32 %v384, %v385
      %395 = vadd.xlane.f32.xlu0 %v394
      %v396 = vpop.xlane.xlu0 %395
      %v397 = vadd.f32 %v386, %v387
      %398 = vadd.xlane.f32.xlu0 %v397
      %v399 = vpop.xlane.xlu0 %398
      %v400 = vmul.f32 %v390, 0.00390625
      %v401 = vmul.f32 %v393, 0.00390625
      %v402 = vmul.f32 %v396, 0.00390625
      %v403 = vmul.f32 %v399, 0.00390625
      %v404 = vld [vmem:[%s0] sm:$0xff]
      %v405 = vld [vmem:[%s0 + $0x8] sm:$0xff]
      %v406 = vld [vmem:[%s0 + $0x10] sm:$0xff]
      %v407 = vld [vmem:[%s0 + $0x18] sm:$0xff]
      %v408 = vmul.f32 %v404, %v400
      %v409 = vmul.f32 %v405, %v401
      %v410 = vmul.f32 %v406, %v402
      %v411 = vmul.f32 %v407, %v403
      %vm412 = vcmask 31744
      %v413 = vsel %vm412, %v408, 0.0
      %v414 = vsel %vm412, %v409, 0.0
      %v415 = vadd.f32 %v413, %v414
      %v416 = vsel %vm412, %v410, 0.0
      %v417 = vadd.f32 %v415, %v416
      %v418 = vsel %vm412, %v411, 0.0
      %v419 = vadd.f32 %v417, %v418
      %v420 = vrot.slane %v419, 4
      %v421 = vadd.f32 %v419, %v420
      %v422 = vrot.slane %v421, 2
      %v423 = vadd.f32 %v421, %v422
      %v424 = vrot.slane %v423, 1
      %v425 = vadd.f32 %v423, %v424
      %v426 = vld [vmem:[%s1] sm:$0x1]
      %v427 = vadd.f32 %v425, %v426
      %v428 = vld [vmem:[#allocation2] sm:$0x1]
      %vm429 = vcmp.ge.f32.partialorder %v427, 0.0
      %431 = vset.pattern.permute.xlu0 0
      %432 = vperm.xlu0 %431, %v428
      %v433 = vpop.permute.xlu0 %432
      %v435 = vperm.slane %v433, 0
      %v436 = vmul.f32 %v435, %v427
      %v437 = vsel %vm429, %v427, %v436
      %v438 = vld [vmem:[%s3] sm:$0xff]
      %v439 = vld [vmem:[%s3 + $0x8] sm:$0xff]
      %v440 = vld [vmem:[%s3 + $0x10] sm:$0xff]
      %v441 = vld [vmem:[%s3 + $0x18] sm:$0xff]
      %v442 = vld [vmem:[%s3 + $0x20] sm:$0xff]
      %v443 = vld [vmem:[%s3 + $0x28] sm:$0xff]
      %v444 = vld [vmem:[%s3 + $0x30] sm:$0xff]
      %v445 = vld [vmem:[%s3 + $0x38] sm:$0xff]
      %v446 = vld [vmem:[%s3 + $0x40] sm:$0xff]
      %v447 = vld [vmem:[%s3 + $0x48] sm:$0xff]
      %v448 = vld [vmem:[%s3 + $0x50] sm:$0xff]
      %v449 = vld [vmem:[%s3 + $0x58] sm:$0xff]
      %v450 = vperm.slane %v437, 0
      %v451 = vmul.f32 %v438, %v450
      %v452 = vmul.f32 %v439, %v450
      %v453 = vmul.f32 %v440, %v450
      %v454 = vmul.f32 %v441, %v450
      %v455 = vmul.f32 %v442, %v450
      %v456 = vmul.f32 %v443, %v450
      %v457 = vmul.f32 %v444, %v450
      %v458 = vmul.f32 %v445, %v450
      %v459 = vmul.f32 %v446, %v450
      %v460 = vmul.f32 %v447, %v450
      %v461 = vmul.f32 %v448, %v450
      %v462 = vmul.f32 %v449, %v450
      %v463 = vsel %vm412, %v451, 0.0
      %464 = vadd.xlane.f32.xlu0 %v463
      %v465 = vpop.xlane.xlu0 %464
      %v466 = vsel %vm412, %v452, 0.0
      %467 = vadd.xlane.f32.xlu0 %v466
      %v468 = vpop.xlane.xlu0 %467
      %v469 = vsel %vm412, %v453, 0.0
      %470 = vadd.xlane.f32.xlu0 %v469
      %v471 = vpop.xlane.xlu0 %470
      %v472 = vsel %vm412, %v454, 0.0
      %473 = vadd.xlane.f32.xlu0 %v472
      %v474 = vpop.xlane.xlu0 %473
      %v475 = vsel %vm412, %v455, 0.0
      %476 = vadd.xlane.f32.xlu0 %v475
      %v477 = vpop.xlane.xlu0 %476
      %v478 = vsel %vm412, %v456, 0.0
      %479 = vadd.xlane.f32.xlu0 %v478
      %v480 = vpop.xlane.xlu0 %479
      %v481 = vsel %vm412, %v457, 0.0
      %482 = vadd.xlane.f32.xlu0 %v481
      %v483 = vpop.xlane.xlu0 %482
      %v484 = vsel %vm412, %v458, 0.0
      %485 = vadd.xlane.f32.xlu0 %v484
      %v486 = vpop.xlane.xlu0 %485
      %v487 = vsel %vm412, %v459, 0.0
      %488 = vadd.xlane.f32.xlu0 %v487
      %v489 = vpop.xlane.xlu0 %488
      %v490 = vsel %vm412, %v460, 0.0
      %491 = vadd.xlane.f32.xlu0 %v490
      %v492 = vpop.xlane.xlu0 %491
      %v493 = vsel %vm412, %v461, 0.0
      %494 = vadd.xlane.f32.xlu0 %v493
      %v495 = vpop.xlane.xlu0 %494
      %v496 = vsel %vm412, %v462, 0.0
      %497 = vadd.xlane.f32.xlu0 %v496
      %v498 = vpop.xlane.xlu0 %497
      %v499 = vld [vmem:[%s4] sm:$0xff]
      %v500 = vld [vmem:[%s4 + $0x8] sm:$0xff]
      %v501 = vld [vmem:[%s4 + $0x10] sm:$0xff]
      %v502 = vld [vmem:[%s4 + $0x18] sm:$0xff]
      %v503 = vld [vmem:[%s4 + $0x20] sm:$0xff]
      %v504 = vld [vmem:[%s4 + $0x28] sm:$0xff]
      %v505 = vld [vmem:[%s4 + $0x30] sm:$0xff]
      %v506 = vld [vmem:[%s4 + $0x38] sm:$0xff]
      %v507 = vld [vmem:[%s4 + $0x40] sm:$0xff]
      %v508 = vld [vmem:[%s4 + $0x48] sm:$0xff]
      %v509 = vld [vmem:[%s4 + $0x50] sm:$0xff]
      %v510 = vld [vmem:[%s4 + $0x58] sm:$0xff]
      %v511 = vadd.f32 %v465, %v499
      %v512 = vadd.f32 %v468, %v500
      %v513 = vadd.f32 %v471, %v501
      %v514 = vadd.f32 %v474, %v502
      %v515 = vadd.f32 %v477, %v503
      %v516 = vadd.f32 %v480, %v504
      %v517 = vadd.f32 %v483, %v505
      %v518 = vadd.f32 %v486, %v506
      %v519 = vadd.f32 %v489, %v507
      %v520 = vadd.f32 %v492, %v508
      %v521 = vadd.f32 %v495, %v509
      %v522 = vadd.f32 %v498, %v510
      %vm523 = vcmask 7168
      %v524 = vsel %vm523, %v511, -inf
      %v525 = vsel %vm523, %v512, -inf
      %v526 = vsel %vm523, %v513, -inf
      %v527 = vsel %vm523, %v514, -inf
      %v528 = vmax.f32 %v524, %v525
      %v529 = vmax.f32 %v526, %v527
      %v530 = vmax.f32 %v528, %v529
      %v531 = vrot.slane %v530, 4
      %v532 = vmax.f32 %v530, %v531
      %v533 = vrot.slane %v532, 2
      %v534 = vmax.f32 %v532, %v533
      %v535 = vrot.slane %v534, 1
      %v536 = vmax.f32 %v534, %v535
      %v537 = vsub.f32 %v511, %v536
      %v538 = vsub.f32 %v512, %v536
      %v539 = vsub.f32 %v513, %v536
      %v540 = vsub.f32 %v514, %v536
      %v541 = vmul.f32 %v537, 1.442695
      %v542 = vpow.pop %v541
      %v543 = vmul.f32 %v538, 1.442695
      %v544 = vpow.pop %v543
      %v545 = vmul.f32 %v539, 1.442695
      %v546 = vpow.pop %v545
      %v547 = vmul.f32 %v540, 1.442695
      %v548 = vpow.pop %v547
      %v549 = vsel %vm523, %v542, 0.0
      %v550 = vsel %vm523, %v544, 0.0
      %v551 = vadd.f32 %v549, %v550
      %v552 = vsel %vm523, %v546, 0.0
      %v553 = vadd.f32 %v551, %v552
      %v554 = vsel %vm523, %v548, 0.0
      %v555 = vadd.f32 %v553, %v554
      %v556 = vrot.slane %v555, 4
      %v557 = vadd.f32 %v555, %v556
      %v558 = vrot.slane %v557, 2
      %v559 = vadd.f32 %v557, %v558
      %v560 = vrot.slane %v559, 1
      %v561 = vadd.f32 %v559, %v560
      %v562 = vrcp.pop %v561
      %v563 = vmul.f32 %v561, %v562
      %v564 = vsub.f32 1.0, %v563
      %v565 = vmul.f32 %v562, %v564
      %v566 = vadd.f32 %v562, %v565
      %vm567 = vweird.f32 %v561
      %vm568 = vweird.f32 %v562
      %vm569 = vmor %vm567, %vm568
      %v570 = vsel %vm569, %v562, %v566
      %v571 = vand.u32 2147483647, %v561
      %vm572 = vcmp.eq.f32.partialorder %v571, 8.507059e+37
      %v573 = vand.u32 %v561, 2147483648
      %v574 = vor.u32 1.1754944e-38, %v573
      %v575 = vsel %vm572, %v574, %v570
      %v576 = vmul.f32 %v542, %v575
      %v577 = vmul.f32 %v544, %v575
      %v578 = vmul.f32 %v546, %v575
      %v579 = vmul.f32 %v548, %v575
      %v580 = vsel %vm523, %v515, -inf
      %v581 = vsel %vm523, %v516, -inf
      %v582 = vsel %vm523, %v517, -inf
      %v583 = vsel %vm523, %v518, -inf
      %v584 = vmax.f32 %v580, %v581
      %v585 = vmax.f32 %v582, %v583
      %v586 = vmax.f32 %v584, %v585
      %v587 = vrot.slane %v586, 4
      %v588 = vmax.f32 %v586, %v587
      %v589 = vrot.slane %v588, 2
      %v590 = vmax.f32 %v588, %v589
      %v591 = vrot.slane %v590, 1
      %v592 = vmax.f32 %v590, %v591
      %v593 = vsub.f32 %v515, %v592
      %v594 = vsub.f32 %v516, %v592
      %v595 = vsub.f32 %v517, %v592
      %v596 = vsub.f32 %v518, %v592
      %v597 = vmul.f32 %v593, 1.442695
      %v598 = vpow.pop %v597
      %v599 = vmul.f32 %v594, 1.442695
      %v600 = vpow.pop %v599
      %v601 = vmul.f32 %v595, 1.442695
      %v602 = vpow.pop %v601
      %v603 = vmul.f32 %v596, 1.442695
      %v604 = vpow.pop %v603
      %v605 = vsel %vm523, %v598, 0.0
      %v606 = vsel %vm523, %v600, 0.0
      %v607 = vadd.f32 %v605, %v606
      %v608 = vsel %vm523, %v602, 0.0
      %v609 = vadd.f32 %v607, %v608
      %v610 = vsel %vm523, %v604, 0.0
      %v611 = vadd.f32 %v609, %v610
      %v612 = vrot.slane %v611, 4
      %v613 = vadd.f32 %v611, %v612
      %v614 = vrot.slane %v613, 2
      %v615 = vadd.f32 %v613, %v614
      %v616 = vrot.slane %v615, 1
      %v617 = vadd.f32 %v615, %v616
      %v618 = vrcp.pop %v617
      %v619 = vmul.f32 %v617, %v618
      %v620 = vsub.f32 1.0, %v619
      %v621 = vmul.f32 %v618, %v620
      %v622 = vadd.f32 %v618, %v621
      %vm623 = vweird.f32 %v617
      %vm624 = vweird.f32 %v618
      %vm625 = vmor %vm623, %vm624
      %v626 = vsel %vm625, %v618, %v622
      %v627 = vand.u32 2147483647, %v617
      %vm628 = vcmp.eq.f32.partialorder %v627, 8.507059e+37
      %v629 = vand.u32 %v617, 2147483648
      %v630 = vor.u32 1.1754944e-38, %v629
      %v631 = vsel %vm628, %v630, %v626
      %v632 = vmul.f32 %v598, %v631
      %v633 = vmul.f32 %v600, %v631
      %v634 = vmul.f32 %v602, %v631
      %v635 = vmul.f32 %v604, %v631
      %v636 = vsel %vm523, %v519, -inf
      %v637 = vsel %vm523, %v520, -inf
      %v638 = vsel %vm523, %v521, -inf
      %v639 = vsel %vm523, %v522, -inf
      %v640 = vmax.f32 %v636, %v637
      %v641 = vmax.f32 %v638, %v639
      %v642 = vmax.f32 %v640, %v641
      %v643 = vrot.slane %v642, 4
      %v644 = vmax.f32 %v642, %v643
      %v645 = vrot.slane %v644, 2
      %v646 = vmax.f32 %v644, %v645
      %v647 = vrot.slane %v646, 1
      %v648 = vmax.f32 %v646, %v647
      %v649 = vsub.f32 %v519, %v648
      %v650 = vsub.f32 %v520, %v648
      %v651 = vsub.f32 %v521, %v648
      %v652 = vsub.f32 %v522, %v648
      %v653 = vmul.f32 %v649, 1.442695
      %v654 = vpow.pop %v653
      %v655 = vmul.f32 %v650, 1.442695
      %v656 = vpow.pop %v655
      %v657 = vmul.f32 %v651, 1.442695
      %v658 = vpow.pop %v657
      %v659 = vmul.f32 %v652, 1.442695
      %v660 = vpow.pop %v659
      %v661 = vsel %vm523, %v654, 0.0
      %v662 = vsel %vm523, %v656, 0.0
      %v663 = vadd.f32 %v661, %v662
      %v664 = vsel %vm523, %v658, 0.0
      %v665 = vadd.f32 %v663, %v664
      %v666 = vsel %vm523, %v660, 0.0
      %v667 = vadd.f32 %v665, %v666
      %v668 = vrot.slane %v667, 4
      %v669 = vadd.f32 %v667, %v668
      %v670 = vrot.slane %v669, 2
      %v671 = vadd.f32 %v669, %v670
      %v672 = vrot.slane %v671, 1
      %v673 = vadd.f32 %v671, %v672
      %v674 = vrcp.pop %v673
      %v675 = vmul.f32 %v673, %v674
      %v676 = vsub.f32 1.0, %v675
      %v677 = vmul.f32 %v674, %v676
      %v678 = vadd.f32 %v674, %v677
      %vm679 = vweird.f32 %v673
      %vm680 = vweird.f32 %v674
      %vm681 = vmor %vm679, %vm680
      %v682 = vsel %vm681, %v674, %v678
      %v683 = vand.u32 2147483647, %v673
      %vm684 = vcmp.eq.f32.partialorder %v683, 8.507059e+37
      %v685 = vand.u32 %v673, 2147483648
      %v686 = vor.u32 1.1754944e-38, %v685
      %v687 = vsel %vm684, %v686, %v682
      %v688 = vmul.f32 %v654, %v687
      %v689 = vmul.f32 %v656, %v687
      %v690 = vmul.f32 %v658, %v687
      %v691 = vmul.f32 %v660, %v687
      %693 = vset.pattern.permute.xlu0 0
      %694 = vperm.xlu0 %693, %v576
      %v695 = vpop.permute.xlu0 %694
      %698 = vset.pattern.permute.xlu0 0
      %699 = vperm.xlu0 %698, %v577
      %v700 = vpop.permute.xlu0 %699
      %703 = vset.pattern.permute.xlu0 0
      %704 = vperm.xlu0 %703, %v578
      %v705 = vpop.permute.xlu0 %704
      %708 = vset.pattern.permute.xlu0 0
      %709 = vperm.xlu0 %708, %v579
      %v710 = vpop.permute.xlu0 %709
      %v712 = vmul.f32 %v348, %v695
      %v713 = vmul.f32 %v349, %v695
      %v714 = vmul.f32 %v350, %v700
      %v715 = vmul.f32 %v351, %v700
      %v716 = vmul.f32 %v352, %v705
      %v717 = vmul.f32 %v353, %v705
      %v718 = vmul.f32 %v354, %v710
      %v719 = vmul.f32 %v355, %v710
      %721 = vset.pattern.permute.xlu0 0
      %722 = vperm.xlu0 %721, %v632
      %v723 = vpop.permute.xlu0 %722
      %726 = vset.pattern.permute.xlu0 0
      %727 = vperm.xlu0 %726, %v633
      %v728 = vpop.permute.xlu0 %727
      %731 = vset.pattern.permute.xlu0 0
      %732 = vperm.xlu0 %731, %v634
      %v733 = vpop.permute.xlu0 %732
      %736 = vset.pattern.permute.xlu0 0
      %737 = vperm.xlu0 %736, %v635
      %v738 = vpop.permute.xlu0 %737
      %v740 = vmul.f32 %v356, %v723
      %v741 = vmul.f32 %v357, %v723
      %v742 = vmul.f32 %v358, %v728
      %v743 = vmul.f32 %v359, %v728
      %v744 = vmul.f32 %v360, %v733
      %v745 = vmul.f32 %v361, %v733
      %v746 = vmul.f32 %v362, %v738
      %v747 = vmul.f32 %v363, %v738
      %v748 = vadd.f32 %v712, %v740
      %v749 = vadd.f32 %v713, %v741
      %v750 = vadd.f32 %v714, %v742
      %v751 = vadd.f32 %v715, %v743
      %v752 = vadd.f32 %v716, %v744
      %v753 = vadd.f32 %v717, %v745
      %v754 = vadd.f32 %v718, %v746
      %v755 = vadd.f32 %v719, %v747
      %757 = vset.pattern.permute.xlu0 0
      %758 = vperm.xlu0 %757, %v688
      %v759 = vpop.permute.xlu0 %758
      %762 = vset.pattern.permute.xlu0 0
      %763 = vperm.xlu0 %762, %v689
      %v764 = vpop.permute.xlu0 %763
      %767 = vset.pattern.permute.xlu0 0
      %768 = vperm.xlu0 %767, %v690
      %v769 = vpop.permute.xlu0 %768
      %772 = vset.pattern.permute.xlu0 0
      %773 = vperm.xlu0 %772, %v691
      %v774 = vpop.permute.xlu0 %773
      %v776 = vmul.f32 %v364, %v759
      %v777 = vmul.f32 %v365, %v759
      %v778 = vmul.f32 %v366, %v764
      %v779 = vmul.f32 %v367, %v764
      %v780 = vmul.f32 %v368, %v769
      %v781 = vmul.f32 %v369, %v769
      %v782 = vmul.f32 %v370, %v774
      %v783 = vmul.f32 %v371, %v774
      %v784 = vadd.f32 %v748, %v776
      %v785 = vadd.f32 %v749, %v777
      %v786 = vadd.f32 %v750, %v778
      %v787 = vadd.f32 %v751, %v779
      %v788 = vadd.f32 %v752, %v780
      %v789 = vadd.f32 %v753, %v781
      %v790 = vadd.f32 %v754, %v782
      %v791 = vadd.f32 %v755, %v783
      %792 = vst [vmem:[%s347] sm:$0xff] %v784
      %793 = vst [vmem:[%s347 + $0x8] sm:$0xff] %v785
      %794 = vst [vmem:[%s347 + $0x10] sm:$0xff] %v786
      %795 = vst [vmem:[%s347 + $0x18] sm:$0xff] %v787
      %796 = vst [vmem:[%s347 + $0x20] sm:$0xff] %v788
      %797 = vst [vmem:[%s347 + $0x28] sm:$0xff] %v789
      %798 = vst [vmem:[%s347 + $0x30] sm:$0xff] %v790
      %799 = vst [vmem:[%s347 + $0x38] sm:$0xff] %v791
      %p800 = scmp.lt.s32.totalorder %s21, 1
      %s801 = scalar_select %p800, %s21, 1
      %s802 = smul.addr %s801, 8
      %s803 = smul.addr %s802, 8
      %s804 = scalar_lea.vmem %s8, %s803
      // Predicated region
      $region53: #{skff_forward.1} parent=51 // pred_check
        %p805 = pneg %p222
      $region54: #{skff_forward.1} parent=51 // pred_check_branch
        %807 = sbr.rel (%p805) target = $region56
      $region55: #{skff_forward.1} parent=51 // pred_region
        _
      $region56: #{skff_forward.1} parent=51 // pred_fallthru
        _
    $region52: #{skff_forward.1} parent=5 // pred_fallthru
      _
    %p808 = scmp.le.s32.totalorder 2, %s16
    // Predicated region
    $region57: #{skff_forward.1} parent=5 // pred_check
      %p809 = pneg %p808
    $region58: #{skff_forward.1} parent=5 // pred_check_branch
      %811 = sbr.rel (%p809) target = $region60
    $region59: #{skff_forward.1} parent=5 // pred_region
      %s812 = ssub.s32 %s16, 2
      // Predicated region
      $region61: #{skff_forward.1} parent=59 // pred_check
        %p813 = pneg %p228
      $region62: #{skff_forward.1} parent=59 // pred_check_branch
        %815 = sbr.rel (%p813) target = $region64
      $region63: #{skff_forward.1} parent=59 // pred_region
        %p816 = scmp.lt.s32.totalorder %s22, 1
        %s817 = scalar_select %p816, %s22, 1
        %s818 = smul.addr %s817, 8
        %s819 = smul.addr %s818, 8
        %s820 = scalar_lea.vmem %s8, %s819
      $region64: #{skff_forward.1} parent=59 // pred_fallthru
        _
    $region60: #{skff_forward.1} parent=5 // pred_fallthru
      _
  $region6: #{skff_forward.1} parent=0 // loop_footer
    %s20 = sadd.s32 1, %s16
  $region7: #{skff_forward.1} parent=0 // loop_footer_branch
    %15 = sbr.rel target = $region3
  $region8: #{skff_forward.1} parent=0 // loop_exit
    _

</llo_original>
